<compile_context>
chip_gen: v7x
topology: tpu7x:2x2x1
jax: 0.10.0
libtpu: 0.0.40
codegen_flags: <defaults>
</compile_context>

<pallas_src>
import jax
import jax.numpy as jnp
from jax.experimental import pallas as pl
from jax.experimental.pallas import tpu as pltpu

# ----------------------- configuration (small shapes) -----------------------
B = 2                  # batch
S = 16                 # sequence length
WORD_DIM = 128         # fixed by the module: nn.Embedding(vocab, 128)
D = 128                # hidden_size (lane-dense: multiple of 128)
VOCAB = 128            # vocab_size (toy)
MAX_POS = S            # max_position_embeddings (default position path needs S == MAX_POS)
TYPE_VOCAB = 3         # nn.Embedding(3, hidden)
TABLE_ROWS = 256       # VOCAB + MAX_POS + TYPE_VOCAB, zero-padded to MXU depth
POS_OFF = VOCAB                 # 128
TYPE_OFF = VOCAB + MAX_POS      # 144
N = B * S
IDX_COLS = 8           # packed index slab width (sublane-friendly padding)
LN_EPS = 1e-12


# ================================ kernel =====================================
def embeddings_kernel(idx_ref, table_ref, gb_ref, out_ref):
    """Fused embedding lookup + sum + LayerNorm for the whole batch in one block.

    idx_ref:   (N, IDX_COLS) int32 — col0 word id, col1 pos id + POS_OFF,
               col2 seg id + TYPE_OFF (pre-offset in the wrapper).
    table_ref: (TABLE_ROWS, D) f32 — stacked [word_emb @ w2; pos_emb; type_emb; 0-pad].
    gb_ref:    (2, D) f32 — row 0 gamma, row 1 beta.
    out_ref:   (N, D) f32.
    """
    n = idx_ref.shape[0]
    rows = table_ref.shape[0]

    # One combined one-hot over the stacked table: three disjoint index ranges,
    # so each row has exactly three 1s and the matmul sums the three embeddings.
    lanes = jax.lax.broadcasted_iota(jnp.int32, (n, rows), 1)
    word_idx = idx_ref[:, 0:1]
    pos_idx = idx_ref[:, 1:2]
    typ_idx = idx_ref[:, 2:3]
    onehot = ((lanes == word_idx) | (lanes == pos_idx) | (lanes == typ_idx)
              ).astype(jnp.float32)

    # Single MXU matmul: (N, 256) @ (256, D)  ->  words + pos + typ
    e = jnp.dot(onehot, table_ref[...], preferred_element_type=jnp.float32)

    # LayerNorm(eps=1e-12) over the hidden (lane) axis, f32 math; rsqrt -> EUP.
    mu = jnp.mean(e, axis=-1, keepdims=True)
    var = jnp.mean((e - mu) ** 2, axis=-1, keepdims=True)
    normed = (e - mu) * jax.lax.rsqrt(var + LN_EPS)
    out_ref[...] = normed * gb_ref[0:1, :] + gb_ref[1:2, :]
    # TODO(synk): nn.Dropout is stochastic only in training; identity at inference.


# ============================ kernel wrapper =================================
def pack_params(params):
    """Offline packing: fold w2 into the word table and stack all tables."""
    fused_word = params["word_emb"] @ params["w2"]                 # (VOCAB, D)
    table = jnp.zeros((TABLE_ROWS, D), jnp.float32)
    table = table.at[:VOCAB].set(fused_word)
    table = table.at[POS_OFF:POS_OFF + MAX_POS].set(params["pos_emb"])
    table = table.at[TYPE_OFF:TYPE_OFF + TYPE_VOCAB].set(params["type_emb"])
    gb = jnp.concatenate([params["gamma"], params["beta"]], axis=0)  # (2, D)
    return table, gb


def embeddings_forward(packed, input_ids, segment_ids, position_ids=None):
    """input_ids/segment_ids: (B, S) int32 -> (B, S, D) float32."""
    table, gb = packed
    Bx, Sx = input_ids.shape
    if position_ids is None:
        # PyTorch default path: arange(max_position_embeddings) expanded over
        # the batch (requires Sx == MAX_POS, as in the module).
        position_ids = jnp.broadcast_to(
            jnp.arange(MAX_POS, dtype=jnp.int32)[None, :], (Bx, Sx))

    n = Bx * Sx
    # Pack the three index streams (pre-offset into the stacked table) into one
    # (N, 8) int32 slab -> one DMA / one load.
    idx = jnp.zeros((n, IDX_COLS), jnp.int32)
    idx = idx.at[:, 0].set(input_ids.reshape(n).astype(jnp.int32))
    idx = idx.at[:, 1].set(position_ids.reshape(n).astype(jnp.int32) + POS_OFF)
    idx = idx.at[:, 2].set(segment_ids.reshape(n).astype(jnp.int32) + TYPE_OFF)

    vmem = pl.BlockSpec(memory_space=pltpu.MemorySpace.VMEM)
    out = pl.pallas_call(
        embeddings_kernel,
        out_shape=jax.ShapeDtypeStruct((n, D), jnp.float32),
        in_specs=[vmem, vmem, vmem],
        out_specs=vmem,
    )(idx, table, gb)
    return out.reshape(Bx, Sx, D)


# ============================ parameters (glue) ==============================
def init_params(key):
    ks = jax.random.split(key, 6)
    word = jax.random.normal(ks[0], (VOCAB, WORD_DIM), jnp.float32) * 0.02
    word = word.at[0].set(0.0)                        # padding_idx=0 -> zero row
    w2 = jax.random.normal(ks[1], (WORD_DIM, D), jnp.float32) * 0.02   # Linear (no bias), (in, out)
    pos = jax.random.normal(ks[2], (MAX_POS, D), jnp.float32) * 0.02
    typ = jax.random.normal(ks[3], (TYPE_VOCAB, D), jnp.float32) * 0.02
    gamma = 1.0 + jax.random.normal(ks[4], (1, D), jnp.float32) * 0.02
    beta = jax.random.normal(ks[5], (1, D), jnp.float32) * 0.02
    return {"word_emb": word, "w2": w2, "pos_emb": pos, "type_emb": typ,
            "gamma": gamma, "beta": beta}


# ======================= pure-JAX reference (check) ==========================
def embeddings_reference(params, input_ids, segment_ids, position_ids):
    w = params["word_emb"][input_ids] @ params["w2"]          # (B, S, D)
    p = params["pos_emb"][position_ids]
    t = params["type_emb"][segment_ids]
    e = w + p + t
    mu = e.mean(-1, keepdims=True)
    var = ((e - mu) ** 2).mean(-1, keepdims=True)
    return (e - mu) / jnp.sqrt(var + LN_EPS) * params["gamma"][0] + params["beta"][0]


# ================================== main =====================================
if __name__ == "__main__":
    key = jax.random.PRNGKey(0)
    k_param, k_ids, k_seg = jax.random.split(key, 3)

    params = init_params(k_param)
    packed = pack_params(params)

    input_ids = jax.random.randint(k_ids, (B, S), 0, VOCAB, jnp.int32)
    segment_ids = jax.random.randint(k_seg, (B, S), 0, TYPE_VOCAB, jnp.int32)
    position_ids = jnp.broadcast_to(
        jnp.arange(MAX_POS, dtype=jnp.int32)[None, :], (B, S))

    out = embeddings_forward(packed, input_ids, segment_ids)   # default position path
    jax.block_until_ready(out)

    ref = embeddings_reference(params, input_ids, segment_ids, position_ids)
    assert out.shape == (B, S, D)
    assert bool(jnp.all(jnp.isfinite(out)))
    assert bool(jnp.allclose(out, ref, atol=1e-3, rtol=1e-3)), \
        float(jnp.max(jnp.abs(out - ref)))
    print("KERNEL_OK")
</pallas_src>

<mosaic_0001>
module attributes {stable_mosaic.version = 11 : i64} {
  func.func @embeddings_kernel(%arg0: memref<32x8xi32, #tpu.memory_space<vmem>>, %arg1: memref<256x128xf32, #tpu.memory_space<vmem>>, %arg2: memref<2x128xf32, #tpu.memory_space<vmem>>, %arg3: memref<32x128xf32, #tpu.memory_space<vmem>>) attributes {dimension_semantics = [], scalar_prefetch = 0 : i64, scratch_operands = 0 : i64, tpu.core_type = #tpu.core_type<tc>} {
    %0 = tpu.iota {dimensions = array<i32: 1>} : vector<32x256xi32>
    %c0 = arith.constant 0 : index
    %c0_0 = arith.constant 0 : index
    %1 = vector.load %arg0[%c0, %c0_0] : memref<32x8xi32, #tpu.memory_space<vmem>>, vector<32x1xi32>
    %c0_1 = arith.constant 0 : index
    %c1 = arith.constant 1 : index
    %2 = vector.load %arg0[%c0_1, %c1] : memref<32x8xi32, #tpu.memory_space<vmem>>, vector<32x1xi32>
    %c0_2 = arith.constant 0 : index
    %c2 = arith.constant 2 : index
    %3 = vector.load %arg0[%c0_2, %c2] : memref<32x8xi32, #tpu.memory_space<vmem>>, vector<32x1xi32>
    %4 = vector.broadcast %1 : vector<32x1xi32> to vector<32x256xi32>
    %5 = arith.cmpi eq, %0, %4 : vector<32x256xi32>
    %6 = vector.broadcast %2 : vector<32x1xi32> to vector<32x256xi32>
    %7 = arith.cmpi eq, %0, %6 : vector<32x256xi32>
    %8 = arith.ori %5, %7 : vector<32x256xi1>
    %9 = vector.broadcast %3 : vector<32x1xi32> to vector<32x256xi32>
    %10 = arith.cmpi eq, %0, %9 : vector<32x256xi32>
    %11 = arith.ori %8, %10 : vector<32x256xi1>
    %12 = arith.extui %11 : vector<32x256xi1> to vector<32x256xi32>
    %13 = arith.sitofp %12 : vector<32x256xi32> to vector<32x256xf32>
    %c0_3 = arith.constant 0 : index
    %c0_4 = arith.constant 0 : index
    %14 = vector.load %arg1[%c0_3, %c0_4] : memref<256x128xf32, #tpu.memory_space<vmem>>, vector<256x128xf32>
    %cst = arith.constant dense<0.000000e+00> : vector<32x128xf32>
    %15 = tpu.matmul %13, %14, %cst {dimension_numbers = #tpu.dot_dimension_numbers<[1], [0], [0], [1], [0, 0, 1, 1], [], []>} : vector<32x256xf32>, vector<256x128xf32>, vector<32x128xf32> -> vector<32x128xf32>
    %cst_5 = arith.constant dense<0.000000e+00> : vector<32xf32>
    %16 = vector.multi_reduction <add>, %15, %cst_5 [1] : vector<32x128xf32> to vector<32xf32>
    %17 = vector.shape_cast %16 : vector<32xf32> to vector<32x1xf32>
    %cst_6 = arith.constant 1.280000e+02 : f32
    %18 = vector.broadcast %cst_6 : f32 to vector<32x1xf32>
    %19 = arith.divf %17, %18 : vector<32x1xf32>
    %20 = vector.broadcast %19 : vector<32x1xf32> to vector<32x128xf32>
    %21 = arith.subf %15, %20 : vector<32x128xf32>
    %22 = arith.mulf %21, %21 : vector<32x128xf32>
    %cst_7 = arith.constant dense<0.000000e+00> : vector<32xf32>
    %23 = vector.multi_reduction <add>, %22, %cst_7 [1] : vector<32x128xf32> to vector<32xf32>
    %24 = vector.shape_cast %23 : vector<32xf32> to vector<32x1xf32>
    %cst_8 = arith.constant 1.280000e+02 : f32
    %25 = vector.broadcast %cst_8 : f32 to vector<32x1xf32>
    %26 = arith.divf %24, %25 : vector<32x1xf32>
    %27 = vector.broadcast %19 : vector<32x1xf32> to vector<32x128xf32>
    %28 = arith.subf %15, %27 : vector<32x128xf32>
    %cst_9 = arith.constant 9.99999996E-13 : f32
    %29 = vector.broadcast %cst_9 : f32 to vector<32x1xf32>
    %30 = arith.addf %26, %29 : vector<32x1xf32>
    %31 = math.rsqrt %30 : vector<32x1xf32>
    %32 = vector.broadcast %31 : vector<32x1xf32> to vector<32x128xf32>
    %33 = arith.mulf %28, %32 : vector<32x128xf32>
    %c0_10 = arith.constant 0 : index
    %c0_11 = arith.constant 0 : index
    %34 = vector.load %arg2[%c0_10, %c0_11] : memref<2x128xf32, #tpu.memory_space<vmem>>, vector<1x128xf32>
    %35 = vector.broadcast %34 : vector<1x128xf32> to vector<32x128xf32>
    %36 = arith.mulf %33, %35 : vector<32x128xf32>
    %c1_12 = arith.constant 1 : index
    %c0_13 = arith.constant 0 : index
    %37 = vector.load %arg2[%c1_12, %c0_13] : memref<2x128xf32, #tpu.memory_space<vmem>>, vector<1x128xf32>
    %38 = vector.broadcast %37 : vector<1x128xf32> to vector<32x128xf32>
    %39 = arith.addf %36, %38 : vector<32x128xf32>
    %c0_14 = arith.constant 0 : index
    %c0_15 = arith.constant 0 : index
    %40 = vector.load %arg3[%c0_14, %c0_15] : memref<32x128xf32, #tpu.memory_space<vmem>>, vector<32x128xf32>
    tpu.vector_store %arg3[%c0_14, %c0_15], %39 {strides = array<i32>} : memref<32x128xf32, #tpu.memory_space<vmem>>, vector<32x128xf32>,
    return
  }
}

</mosaic_0001>

<llo_original>
// kernel: tpu_custom_call.1
$region0: #{tpu_custom_call.1}
  #allocation0 [shape = 'u32[]', space=smem, size = 0x4, offset = 0x4, fixed_abs, tag = 'smem constant byte address 0x4 - core index']
  #allocation1 [shape = 'u32[144,128]{1,0:T(1,128)}', space=vmem, size = 0x12000, scoped, tag = 'internal scratch']
  %s0 = inlined_call_operand.vmem [shape: s32[32,8], index: 0, kind: input, shape index: {}]
  %s1 = inlined_call_operand.hbm [shape: f32[256,128], index: 1, kind: input, shape index: {}]
  %s2 = inlined_call_operand.vmem [shape: f32[2,128], index: 2, kind: input, shape index: {}]
  %s3 = inlined_call_operand.hbm [shape: f32[32,128], index: 3, kind: output, shape index: {}]
  %s4 = sld [smem:[#allocation0]]
  $region26: #{tpu_custom_call.1} parent=0
    _
  %s6 = ssub.s32 1, %s4
  %s7 = scalar_select 0, %s6, %s4
  $region1: #{tpu_custom_call.1} parent=0
    #allocation2 [shape = 'u8[131072]{0}', space=vmem, size = 0x20000, scoped, tag = 'input window, operand 1, single buffered']
    #allocation3 [shape = 's32[1]{0}', space=sflag, size = 0x4, scoped, tag = 'scoped memory for tpu_custom_call.1']
    #allocation4 [shape = 's32[1]{0}', space=sflag, size = 0x4, scoped, tag = 'scoped memory for tpu_custom_call.1']
    #allocation5 [shape = 'u8[16384]{0}', space=vmem, size = 0x4000, scoped, tag = 'output window, operand 0, single buffered']
    %8 = vsyncpa [#allocation3], 0
    %9 = vsyncpa [#allocation4], 0
    // Predicated region
    $region2: #{tpu_custom_call.1} parent=1 // pred_check
      _
    $region3: #{tpu_custom_call.1} parent=1 // pred_check_branch
      %11 = sbr.rel (0) target = $region5
    $region4: #{tpu_custom_call.1} parent=1 // pred_region
      _
    $region5: #{tpu_custom_call.1} parent=1 // pred_fallthru
      _
    // Predicated region
    $region6: #{tpu_custom_call.1} parent=1 // pred_check
      _
    $region7: #{tpu_custom_call.1} parent=1 // pred_check_branch
      %13 = sbr.rel (0) target = $region9
    $region8: #{tpu_custom_call.1} parent=1 // pred_region
      %s15 = ssub.s32 4096, 4096
      %16 = vsyncadd [#allocation3], %s15
      %s17 = sshll.u32 [#allocation2], 4
      %s18 = int_to_ptr.vmem [resolvable:$true] %s17
      %23 = dma.hbm_to_vmem [thread:$0]  %s1, 4096, %s18, [#allocation3], 128, 128, 8
    $region9: #{tpu_custom_call.1} parent=1 // pred_fallthru
      _
    // Predicated region
    $region10: #{tpu_custom_call.1} parent=1 // pred_check
      _
    $region11: #{tpu_custom_call.1} parent=1 // pred_check_branch
      %25 = sbr.rel (0) target = $region13
    $region12: #{tpu_custom_call.1} parent=1 // pred_region
      _
    $region13: #{tpu_custom_call.1} parent=1 // pred_fallthru
      _
    // Predicated region
    $region14: #{tpu_custom_call.1} parent=1 // pred_check
      _
    $region15: #{tpu_custom_call.1} parent=1 // pred_check_branch
      %27 = sbr.rel (0) target = $region17
    $region16: #{tpu_custom_call.1} parent=1 // pred_region
      %28 = dma.done [#allocation3], 4096
    $region17: #{tpu_custom_call.1} parent=1 // pred_fallthru
      _
    %v29 = vlaneseq
    %v30 = vand.u32 %v29, 127
    %v31 = vadd.s32 %v30, 128
    %v32 = vld [vmem:[%s0] sm:$0xff]
    %v33 = vld [vmem:[%s0 + $0x8] sm:$0xff]
    %v34 = vld [vmem:[%s0 + $0x10] sm:$0xff]
    %v35 = vld [vmem:[%s0 + $0x18] sm:$0xff]
    %36 = vset.pattern.permute.xlu0 0
    %37 = vperm.xlu0 %36, %v32
    %v38 = vpop.permute.xlu0 %37
    %39 = vset.pattern.permute.xlu0 0
    %40 = vperm.xlu0 %39, %v33
    %v41 = vpop.permute.xlu0 %40
    %42 = vset.pattern.permute.xlu0 0
    %43 = vperm.xlu0 %42, %v34
    %v44 = vpop.permute.xlu0 %43
    %45 = vset.pattern.permute.xlu0 0
    %46 = vperm.xlu0 %45, %v35
    %v47 = vpop.permute.xlu0 %46
    %vm48 = vcmp.eq.s32.totalorder %v30, %v38
    %vm49 = vcmp.eq.s32.totalorder %v31, %v38
    %vm50 = vcmp.eq.s32.totalorder %v30, %v41
    %vm51 = vcmp.eq.s32.totalorder %v31, %v41
    %vm52 = vcmp.eq.s32.totalorder %v30, %v44
    %vm53 = vcmp.eq.s32.totalorder %v31, %v44
    %vm54 = vcmp.eq.s32.totalorder %v30, %v47
    %vm55 = vcmp.eq.s32.totalorder %v31, %v47
    %56 = vset.pattern.permute.xlu0 1
    %57 = vperm.xlu0 %56, %v32
    %v58 = vpop.permute.xlu0 %57
    %59 = vset.pattern.permute.xlu0 1
    %60 = vperm.xlu0 %59, %v33
    %v61 = vpop.permute.xlu0 %60
    %62 = vset.pattern.permute.xlu0 1
    %63 = vperm.xlu0 %62, %v34
    %v64 = vpop.permute.xlu0 %63
    %65 = vset.pattern.permute.xlu0 1
    %66 = vperm.xlu0 %65, %v35
    %v67 = vpop.permute.xlu0 %66
    %vm68 = vcmp.eq.s32.totalorder %v30, %v58
    %vm69 = vcmp.eq.s32.totalorder %v31, %v58
    %vm70 = vcmp.eq.s32.totalorder %v30, %v61
    %vm71 = vcmp.eq.s32.totalorder %v31, %v61
    %vm72 = vcmp.eq.s32.totalorder %v30, %v64
    %vm73 = vcmp.eq.s32.totalorder %v31, %v64
    %vm74 = vcmp.eq.s32.totalorder %v30, %v67
    %vm75 = vcmp.eq.s32.totalorder %v31, %v67
    %vm76 = vmor %vm48, %vm68
    %vm77 = vmor %vm49, %vm69
    %vm78 = vmor %vm50, %vm70
    %vm79 = vmor %vm51, %vm71
    %vm80 = vmor %vm52, %vm72
    %vm81 = vmor %vm53, %vm73
    %vm82 = vmor %vm54, %vm74
    %vm83 = vmor %vm55, %vm75
    %84 = vset.pattern.permute.xlu0 2
    %85 = vperm.xlu0 %84, %v32
    %v86 = vpop.permute.xlu0 %85
    %87 = vset.pattern.permute.xlu0 2
    %88 = vperm.xlu0 %87, %v33
    %v89 = vpop.permute.xlu0 %88
    %90 = vset.pattern.permute.xlu0 2
    %91 = vperm.xlu0 %90, %v34
    %v92 = vpop.permute.xlu0 %91
    %93 = vset.pattern.permute.xlu0 2
    %94 = vperm.xlu0 %93, %v35
    %v95 = vpop.permute.xlu0 %94
    %vm96 = vcmp.eq.s32.totalorder %v30, %v86
    %vm97 = vcmp.eq.s32.totalorder %v31, %v86
    %vm98 = vcmp.eq.s32.totalorder %v30, %v89
    %vm99 = vcmp.eq.s32.totalorder %v31, %v89
    %vm100 = vcmp.eq.s32.totalorder %v30, %v92
    %vm101 = vcmp.eq.s32.totalorder %v31, %v92
    %vm102 = vcmp.eq.s32.totalorder %v30, %v95
    %vm103 = vcmp.eq.s32.totalorder %v31, %v95
    %vm104 = vmor %vm76, %vm96
    %vm105 = vmor %vm77, %vm97
    %vm106 = vmor %vm78, %vm98
    %vm107 = vmor %vm79, %vm99
    %vm108 = vmor %vm80, %vm100
    %vm109 = vmor %vm81, %vm101
    %vm110 = vmor %vm82, %vm102
    %vm111 = vmor %vm83, %vm103
    %v112 = vsel %vm104, 1, 0
    %v113 = vsel %vm105, 1, 0
    %v114 = vsel %vm106, 1, 0
    %v115 = vsel %vm107, 1, 0
    %v116 = vsel %vm108, 1, 0
    %v117 = vsel %vm109, 1, 0
    %v118 = vsel %vm110, 1, 0
    %v119 = vsel %vm111, 1, 0
    %v120 = vcvt.s32.f32 %v112
    %v121 = vcvt.s32.f32 %v113
    %v122 = vcvt.s32.f32 %v114
    %v123 = vcvt.s32.f32 %v115
    %v124 = vcvt.s32.f32 %v116
    %v125 = vcvt.s32.f32 %v117
    %v126 = vcvt.s32.f32 %v118
    %v127 = vcvt.s32.f32 %v119
    %v128 = vld [vmem:[#allocation2] sm:$0xff]
    %v129 = vld [vmem:[#allocation2 + $0x8] sm:$0xff]
    %v130 = vld [vmem:[#allocation2 + $0x10] sm:$0xff]
    %v131 = vld [vmem:[#allocation2 + $0x18] sm:$0xff]
    %v132 = vld [vmem:[#allocation2 + $0x20] sm:$0xff]
    %v133 = vld [vmem:[#allocation2 + $0x28] sm:$0xff]
    %v134 = vld [vmem:[#allocation2 + $0x30] sm:$0xff]
    %v135 = vld [vmem:[#allocation2 + $0x38] sm:$0xff]
    %v136 = vld [vmem:[#allocation2 + $0x40] sm:$0xff]
    %v137 = vld [vmem:[#allocation2 + $0x48] sm:$0xff]
    %v138 = vld [vmem:[#allocation2 + $0x50] sm:$0xff]
    %v139 = vld [vmem:[#allocation2 + $0x58] sm:$0xff]
    %v140 = vld [vmem:[#allocation2 + $0x60] sm:$0xff]
    %v141 = vld [vmem:[#allocation2 + $0x68] sm:$0xff]
    %v142 = vld [vmem:[#allocation2 + $0x70] sm:$0xff]
    %v143 = vld [vmem:[#allocation2 + $0x78] sm:$0xff]
    %v144 = vld [vmem:[#allocation2 + $0x80] sm:$0xff]
    %v145 = vld [vmem:[#allocation2 + $0x88] sm:$0xff]
    %v146 = vld [vmem:[#allocation2 + $0x90] sm:$0xff]
    %v147 = vld [vmem:[#allocation2 + $0x98] sm:$0xff]
    %v148 = vld [vmem:[#allocation2 + $0xa0] sm:$0xff]
    %v149 = vld [vmem:[#allocation2 + $0xa8] sm:$0xff]
    %v150 = vld [vmem:[#allocation2 + $0xb0] sm:$0xff]
    %v151 = vld [vmem:[#allocation2 + $0xb8] sm:$0xff]
    %v152 = vld [vmem:[#allocation2 + $0xc0] sm:$0xff]
    %v153 = vld [vmem:[#allocation2 + $0xc8] sm:$0xff]
    %v154 = vld [vmem:[#allocation2 + $0xd0] sm:$0xff]
    %v155 = vld [vmem:[#allocation2 + $0xd8] sm:$0xff]
    %v156 = vld [vmem:[#allocation2 + $0xe0] sm:$0xff]
    %v157 = vld [vmem:[#allocation2 + $0xe8] sm:$0xff]
    %v158 = vld [vmem:[#allocation2 + $0xf0] sm:$0xff]
    %v159 = vld [vmem:[#allocation2 + $0xf8] sm:$0xff]
    %160 = vmatprep.subr.mxu0 0.0
    %161 = vmatpush1.msra.mxu0 %v128
    %162 = vmatprep.subr.mxu0 0.0
    %163 = vmatpush1.msra.mxu0 %v129
    %164 = vmatprep.subr.mxu0 0.0
    %165 = vmatpush1.msra.mxu0 %v130
    %166 = vmatprep.subr.mxu0 0.0
    %167 = vmatpush1.msra.mxu0 %v131
    %168 = vmatprep.subr.mxu0 0.0
    %169 = vmatpush1.msra.mxu0 %v132
    %170 = vmatprep.subr.mxu0 0.0
    %171 = vmatpush1.msra.mxu0 %v133
    %172 = vmatprep.subr.mxu0 0.0
    %173 = vmatpush1.msra.mxu0 %v134
    %174 = vmatprep.subr.mxu0 0.0
    %175 = vmatpush1.msra.mxu0 %v135
    %176 = vmatprep.subr.mxu0 0.0
    %177 = vmatpush1.msra.mxu0 %v136
    %178 = vmatprep.subr.mxu0 0.0
    %179 = vmatpush1.msra.mxu0 %v137
    %180 = vmatprep.subr.mxu0 0.0
    %181 = vmatpush1.msra.mxu0 %v138
    %182 = vmatprep.subr.mxu0 0.0
    %183 = vmatpush1.msra.mxu0 %v139
    %184 = vmatprep.subr.mxu0 0.0
    %185 = vmatpush1.msra.mxu0 %v140
    %186 = vmatprep.subr.mxu0 0.0
    %187 = vmatpush1.msra.mxu0 %v141
    %188 = vmatprep.subr.mxu0 0.0
    %189 = vmatpush1.msra.mxu0 %v142
    %190 = vmatprep.subr.mxu0 0.0
    %191 = vmatpush1.msra.mxu0 %v143
    %192 = vmatprep.subr.mxu0 0.0
    %193 = vmatpush1.msra.mxu0 %v144
    %194 = vmatprep.subr.mxu0 0.0
    %195 = vmatpush1.msra.mxu0 %v145
    %196 = vmatprep.subr.mxu0 0.0
    %197 = vmatpush1.msra.mxu0 %v146
    %198 = vmatprep.subr.mxu0 0.0
    %199 = vmatpush1.msra.mxu0 %v147
    %200 = vmatprep.subr.mxu0 0.0
    %201 = vmatpush1.msra.mxu0 %v148
    %202 = vmatprep.subr.mxu0 0.0
    %203 = vmatpush1.msra.mxu0 %v149
    %204 = vmatprep.subr.mxu0 0.0
    %205 = vmatpush1.msra.mxu0 %v150
    %206 = vmatprep.subr.mxu0 0.0
    %207 = vmatpush1.msra.mxu0 %v151
    %208 = vmatprep.subr.mxu0 0.0
    %209 = vmatpush1.msra.mxu0 %v152
    %210 = vmatprep.subr.mxu0 0.0
    %211 = vmatpush1.msra.mxu0 %v153
    %212 = vmatprep.subr.mxu0 0.0
    %213 = vmatpush1.msra.mxu0 %v154
    %214 = vmatprep.subr.mxu0 0.0
    %215 = vmatpush1.msra.mxu0 %v155
    %216 = vmatprep.subr.mxu0 0.0
    %217 = vmatpush1.msra.mxu0 %v156
    %218 = vmatprep.subr.mxu0 0.0
    %219 = vmatpush1.msra.mxu0 %v157
    %220 = vmatprep.subr.mxu0 0.0
    %221 = vmatpush1.msra.mxu0 %v158
    %222 = vmatprep.subr.mxu0 0.0
    %223 = vmatpush1.msra.mxu0 %v159
    %224 = vmatprep.mubr.f32.mxu0 %v121
    %225 = vmatmul.mubr.f32.gmra.mrb[0].mxu0 %v120
    %v226 = vpop.f32.mrb[0].mxu0
    %v227 = vadd.f32 0.0, %v226
    %v228 = vpop.f32.mrb[0].mxu0
    %229 = vmatprep.mubr.f32.mxu0 %v123
    %230 = vmatmul.mubr.f32.gmra.mrb[0].mxu0 %v122
    %v231 = vpop.f32.mrb[0].mxu0
    %v232 = vadd.f32 0.0, %v231
    %v233 = vpop.f32.mrb[0].mxu0
    %234 = vmatprep.mubr.f32.mxu0 %v125
    %235 = vmatmul.mubr.f32.gmra.mrb[0].mxu0 %v124
    %v236 = vpop.f32.mrb[0].mxu0
    %v237 = vadd.f32 0.0, %v236
    %v238 = vpop.f32.mrb[0].mxu0
    %239 = vmatprep.mubr.f32.mxu0 %v127
    %240 = vmatmul.mubr.f32.gmra.mrb[0].mxu0 %v126
    %v241 = vpop.f32.mrb[0].mxu0
    %v242 = vadd.f32 0.0, %v241
    %v243 = vpop.f32.mrb[0].mxu0
    %244 = vdwg.mxu0
    %245 = vadd.xlane.f32.xlu0 %v227
    %v246 = vpop.xlane.xlu0 %245
    %247 = vadd.xlane.f32.xlu0 %v232
    %v248 = vpop.xlane.xlu0 %247
    %249 = vadd.xlane.f32.xlu0 %v237
    %v250 = vpop.xlane.xlu0 %249
    %251 = vadd.xlane.f32.xlu0 %v242
    %v252 = vpop.xlane.xlu0 %251
    %v253 = vrcp.pop 128.0
    %v254 = vmul.f32 %v246, %v253
    %v255 = vmul.f32 %v248, %v253
    %v256 = vmul.f32 %v250, %v253
    %v257 = vmul.f32 %v252, %v253
    %v258 = vsub.f32 %v227, %v254
    %v259 = vsub.f32 %v232, %v255
    %v260 = vsub.f32 %v237, %v256
    %v261 = vsub.f32 %v242, %v257
    %v262 = vmul.f32 %v258, %v258
    %v263 = vmul.f32 %v259, %v259
    %v264 = vmul.f32 %v260, %v260
    %v265 = vmul.f32 %v261, %v261
    %266 = vadd.xlane.f32.xlu0 %v262
    %v267 = vpop.xlane.xlu0 %266
    %268 = vadd.xlane.f32.xlu0 %v263
    %v269 = vpop.xlane.xlu0 %268
    %270 = vadd.xlane.f32.xlu0 %v264
    %v271 = vpop.xlane.xlu0 %270
    %272 = vadd.xlane.f32.xlu0 %v265
    %v273 = vpop.xlane.xlu0 %272
    %v274 = vmul.f32 %v267, %v253
    %v275 = vmul.f32 %v269, %v253
    %v276 = vmul.f32 %v271, %v253
    %v277 = vmul.f32 %v273, %v253
    %v278 = vadd.f32 %v274, 1e-12
    %v279 = vadd.f32 %v275, 1e-12
    %v280 = vadd.f32 %v276, 1e-12
    %v281 = vadd.f32 %v277, 1e-12
    %v282 = vrsqrt.pop %v278
    %v283 = vrsqrt.pop %v279
    %v284 = vrsqrt.pop %v280
    %v285 = vrsqrt.pop %v281
    %v286 = vmul.f32 %v258, %v282
    %v287 = vmul.f32 %v259, %v283
    %v288 = vmul.f32 %v260, %v284
    %v289 = vmul.f32 %v261, %v285
    %v290 = vld [vmem:[%s2] sm:$0x1]
    %v291 = vlaneseq
    %v292 = vshrl.u32 %v291, 7
    %v293 = vsub.s32 0, %v292
    %v294 = vrot.slane %v290, %v293
    %v295 = vmul.f32 %v286, %v294
    %v296 = vmul.f32 %v287, %v294
    %v297 = vmul.f32 %v288, %v294
    %v298 = vmul.f32 %v289, %v294
    %v299 = vld [vmem:[%s2 + $0x1] sm:$0x1]
    %v300 = vlaneseq
    %v301 = vshrl.u32 %v300, 7
    %v302 = vsub.s32 0, %v301
    %v303 = vrot.slane %v299, %v302
    %v304 = vadd.f32 %v295, %v303
    %v305 = vadd.f32 %v296, %v303
    %v306 = vadd.f32 %v297, %v303
    %v307 = vadd.f32 %v298, %v303
    %308 = vst [vmem:[#allocation5] sm:$0xff] %v304
    %309 = vst [vmem:[#allocation5 + $0x8] sm:$0xff] %v305
    %310 = vst [vmem:[#allocation5 + $0x10] sm:$0xff] %v306
    %311 = vst [vmem:[#allocation5 + $0x18] sm:$0xff] %v307
    // Predicated region
    $region18: #{tpu_custom_call.1} parent=1 // pred_check
      _
    $region19: #{tpu_custom_call.1} parent=1 // pred_check_branch
      %313 = sbr.rel (0) target = $region21
    $region20: #{tpu_custom_call.1} parent=1 // pred_region
      %s315 = ssub.s32 512, 512
      %316 = vsyncadd [#allocation4], %s315
      %s317 = sshll.u32 [#allocation5], 4
      %s318 = int_to_ptr.vmem [resolvable:$true] %s317
      %323 = dma.vmem_to_hbm [thread:$0]  %s318, 512, %s3, [#allocation4], 128, 128, 8
    $region21: #{tpu_custom_call.1} parent=1 // pred_fallthru
      _
    // Predicated region
    $region22: #{tpu_custom_call.1} parent=1 // pred_check
      _
    $region23: #{tpu_custom_call.1} parent=1 // pred_check_branch
      %325 = sbr.rel (0) target = $region25
    $region24: #{tpu_custom_call.1} parent=1 // pred_region
      %326 = dma.done [#allocation4], 512
    $region25: #{tpu_custom_call.1} parent=1 // pred_fallthru
      _
    %327 = vsyncpa [#allocation3], 1
    %328 = vsyncpa [#allocation4], 1

</llo_original>
